<compile_context>
chip_gen: v5e
topology: v5e:2x2
jax: 0.10.0
libtpu: 0.0.40
codegen_flags: <defaults>
</compile_context>

<pallas_src>
import functools

import jax
import jax.numpy as jnp
from jax import lax
from jax.experimental import pallas as pl
from jax.experimental.pallas import tpu as pltpu


def _round_up(x: int, m: int) -> int:
    return (x + m - 1) // m * m


def _ffn_kernel(x_ref, w1_ref, b1_ref, w2_ref, b2_ref, g_ref, beta_ref, o_ref,
                *, eps: float, d_in: int):
    # x_ref: (tm, Dp) tile of tokens in native dtype (bf16 stays bf16 on the MXU).
    x = x_ref[...]

    # w_1 (Conv1d k=1) == linear: h = relu(x @ W1^T + b1), f32 accumulation.
    h = jnp.dot(x, w1_ref[...], preferred_element_type=jnp.float32)
    h = jnp.maximum(h + b1_ref[...], 0.0)
    # cast back to the matmul dtype for the second MXU pass
    h = h.astype(x.dtype)

    # w_2 (Conv1d k=1) == linear: y = h @ W2^T + b2
    y = jnp.dot(h, w2_ref[...], preferred_element_type=jnp.float32) + b2_ref[...]

    # dropout (eval mode) -> identity; residual add in f32
    r = y + x.astype(jnp.float32)

    # LayerNorm over the true d_in channels (pad channels of r are exactly zero,
    # so sums over the padded width equal sums over the true width).
    d_pad = r.shape[-1]
    inv_n = 1.0 / float(d_in)
    mu = jnp.sum(r, axis=-1, keepdims=True) * inv_n
    cen = r - mu
    if d_pad != d_in:
        mask = lax.broadcasted_iota(jnp.int32, (1, d_pad), 1) < d_in
        cen = jnp.where(mask, cen, 0.0)
    var = jnp.sum(cen * cen, axis=-1, keepdims=True) * inv_n

    # Pad-channel outputs are garbage-free (cen == 0 there) and are sliced off
    # in the wrapper anyway; gamma/beta pads are zero.
    normed = cen * lax.rsqrt(var + eps)
    o_ref[...] = (normed * g_ref[...] + beta_ref[...]).astype(o_ref.dtype)


def _pick_tile_and_vmem(n_tok, d_in_p, d_hid_p, itemsize, tm_pref, sub):
    """Pick the largest sublane-aligned token tile whose working set fits VMEM."""
    budget = 44 * 1024 * 1024  # leave headroom below v7x's 32 MiB scoped default bump

    def need(tm):
        return (
            4 * tm * d_in_p * itemsize              # x/out tiles, double-buffered
            + 2 * d_in_p * d_hid_p * itemsize       # W1^T, W2^T (single-buffered)
            + 2 * (d_hid_p + 3 * d_in_p) * 4        # biases / gamma / beta
            + tm * (d_hid_p + 2 * d_in_p) * 4       # f32 intermediates (h, y/r)
        )

    tm = min(_round_up(tm_pref, sub), _round_up(n_tok, sub))
    while tm > sub and 2 * need(tm) > budget:
        tm = _round_up(tm // 2, sub)
    vmem_limit = int(min(max(2 * need(tm), 16 * 1024 * 1024), 48 * 1024 * 1024))
    return tm, vmem_limit


def positionwise_feed_forward(x, w1, b1, w2, b2, gamma, beta,
                              *, eps=1e-5, tm=512):
    """x: (B, L, d_in). w1: (d_hid, d_in), w2: (d_in, d_hid). Returns (B, L, d_in)."""
    B, L, d_in = x.shape
    d_hid = w1.shape[0]
    n_tok = B * L

    itemsize = jnp.dtype(x.dtype).itemsize
    sub = 8 if itemsize >= 4 else 16                 # sublane packing (f32 vs bf16)

    # Lane-dense channel dims (multiples of 128).
    d_in_p = _round_up(d_in, 128)
    d_hid_p = _round_up(d_hid, 128)

    # Token tile: as large as VMEM allows (prefer tm), clamped for tiny inputs.
    tm_eff, vmem_limit = _pick_tile_and_vmem(n_tok, d_in_p, d_hid_p, itemsize, tm, sub)
    n_pad = _round_up(n_tok, tm_eff)

    # Flatten + zero-pad tokens/channels (zeros keep the math exact, see kernel).
    x2d = x.reshape(n_tok, d_in)
    x2d = jnp.pad(x2d, ((0, n_pad - n_tok), (0, d_in_p - d_in)))

    # Pre-transpose + pad weights so the kernel does plain row-major matmuls.
    w1_t = jnp.pad(jnp.transpose(w1).astype(x.dtype),
                   ((0, d_in_p - d_in), (0, d_hid_p - d_hid)))      # (Dp, Dh)
    w2_t = jnp.pad(jnp.transpose(w2).astype(x.dtype),
                   ((0, d_hid_p - d_hid), (0, d_in_p - d_in)))      # (Dh, Dp)
    b1_2d = jnp.pad(b1.astype(jnp.float32).reshape(1, d_hid),
                    ((0, 0), (0, d_hid_p - d_hid)))
    b2_2d = jnp.pad(b2.astype(jnp.float32).reshape(1, d_in),
                    ((0, 0), (0, d_in_p - d_in)))
    g_2d = jnp.pad(gamma.astype(jnp.float32).reshape(1, d_in),
                   ((0, 0), (0, d_in_p - d_in)))
    beta_2d = jnp.pad(beta.astype(jnp.float32).reshape(1, d_in),
                      ((0, 0), (0, d_in_p - d_in)))

    grid = (n_pad // tm_eff,)

    # Resident (constant index_map) params -> single-buffered to save VMEM.
    def _resident(shape):
        return pl.BlockSpec(shape, lambda i: (0, 0), pipeline_mode=pl.Buffered(1))

    cost = pl.CostEstimate(
        flops=2 * 2 * n_pad * d_in_p * d_hid_p + 10 * n_pad * d_in_p,
        transcendentals=n_pad,
        bytes_accessed=(2 * n_pad * d_in_p + 2 * d_in_p * d_hid_p) * itemsize
                       + (d_hid_p + 3 * d_in_p) * 4,
    )

    out2d = pl.pallas_call(
        functools.partial(_ffn_kernel, eps=eps, d_in=d_in),
        out_shape=jax.ShapeDtypeStruct((n_pad, d_in_p), x.dtype),
        grid_spec=pltpu.PrefetchScalarGridSpec(
            num_scalar_prefetch=0,
            grid=grid,
            in_specs=[
                pl.BlockSpec((tm_eff, d_in_p), lambda i: (i, 0)),   # x tile (streamed)
                _resident((d_in_p, d_hid_p)),                       # W1^T
                _resident((1, d_hid_p)),                            # b1
                _resident((d_hid_p, d_in_p)),                       # W2^T
                _resident((1, d_in_p)),                             # b2
                _resident((1, d_in_p)),                             # gamma
                _resident((1, d_in_p)),                             # beta
            ],
            out_specs=pl.BlockSpec((tm_eff, d_in_p), lambda i: (i, 0)),
        ),
        compiler_params=pltpu.CompilerParams(
            dimension_semantics=("parallel",),
            vmem_limit_bytes=vmem_limit,
        ),
        cost_estimate=cost,
    )(x2d, w1_t, b1_2d, w2_t, b2_2d, g_2d, beta_2d)

    return out2d[:n_tok, :d_in].reshape(B, L, d_in)


def _reference(x, w1, b1, w2, b2, gamma, beta, eps=1e-5):
    h = jnp.maximum(jnp.einsum("bld,hd->blh", x, w1) + b1, 0.0)
    y = jnp.einsum("blh,dh->bld", h, w2) + b2
    r = y + x
    mu = jnp.mean(r, axis=-1, keepdims=True)
    var = jnp.mean((r - mu) ** 2, axis=-1, keepdims=True)
    return (r - mu) / jnp.sqrt(var + eps) * gamma + beta


if __name__ == "__main__":
    B, L, d_in, d_hid = 2, 16, 32, 64

    key = jax.random.PRNGKey(0)
    kx, k1, kb1, k2, kb2 = jax.random.split(key, 5)

    x = jax.random.normal(kx, (B, L, d_in), dtype=jnp.float32)

    # Parameter shapes match Conv1d(d_in, d_hid, 1) / Conv1d(d_hid, d_in, 1) / LayerNorm(d_in)
    w1 = jax.random.normal(k1, (d_hid, d_in), dtype=jnp.float32) * 0.1
    b1 = jax.random.normal(kb1, (d_hid,), dtype=jnp.float32) * 0.1
    w2 = jax.random.normal(k2, (d_in, d_hid), dtype=jnp.float32) * 0.1
    b2 = jax.random.normal(kb2, (d_in,), dtype=jnp.float32) * 0.1
    gamma = jnp.ones((d_in,), dtype=jnp.float32)
    beta = jnp.zeros((d_in,), dtype=jnp.float32)

    out = positionwise_feed_forward(x, w1, b1, w2, b2, gamma, beta)
    out = jax.block_until_ready(out)

    ref = _reference(x, w1, b1, w2, b2, gamma, beta)
    assert out.shape == (B, L, d_in)
    assert jnp.allclose(out, ref, atol=1e-4, rtol=1e-4), "mismatch vs reference"

    print("KERNEL_OK")
</pallas_src>

<mosaic_0001>
module attributes {stable_mosaic.version = 11 : i64} {
  func.func @_ffn_kernel(%arg0: i32, %arg1: memref<32x128xf32, #tpu.memory_space<vmem>>, %arg2: memref<128x128xf32, #tpu.memory_space<vmem>>, %arg3: memref<1x128xf32, #tpu.memory_space<vmem>>, %arg4: memref<128x128xf32, #tpu.memory_space<vmem>>, %arg5: memref<1x128xf32, #tpu.memory_space<vmem>>, %arg6: memref<1x128xf32, #tpu.memory_space<vmem>>, %arg7: memref<1x128xf32, #tpu.memory_space<vmem>>, %arg8: memref<32x128xf32, #tpu.memory_space<vmem>>) attributes {dimension_semantics = [#tpu.dimension_semantics<parallel>], iteration_bounds = array<i64: 1>, scalar_prefetch = 0 : i64, scratch_operands = 0 : i64, tpu.core_type = #tpu.core_type<tc>, window_params = [{transform_indices = @transform_0, window_bounds = array<i64: 32, 128>}, {pipeline_mode = #tpu.pipeline_mode<synchronous>, transform_indices = @transform_1, window_bounds = array<i64: 128, 128>}, {pipeline_mode = #tpu.pipeline_mode<synchronous>, transform_indices = @transform_2, window_bounds = array<i64: 1, 128>}, {pipeline_mode = #tpu.pipeline_mode<synchronous>, transform_indices = @transform_3, window_bounds = array<i64: 128, 128>}, {pipeline_mode = #tpu.pipeline_mode<synchronous>, transform_indices = @transform_4, window_bounds = array<i64: 1, 128>}, {pipeline_mode = #tpu.pipeline_mode<synchronous>, transform_indices = @transform_5, window_bounds = array<i64: 1, 128>}, {pipeline_mode = #tpu.pipeline_mode<synchronous>, transform_indices = @transform_6, window_bounds = array<i64: 1, 128>}, {transform_indices = @transform_7, window_bounds = array<i64: 32, 128>}]} {
    %c0 = arith.constant 0 : index
    %c0_0 = arith.constant 0 : index
    %0 = vector.load %arg1[%c0, %c0_0] : memref<32x128xf32, #tpu.memory_space<vmem>>, vector<32x128xf32>
    %c0_1 = arith.constant 0 : index
    %c0_2 = arith.constant 0 : index
    %1 = vector.load %arg2[%c0_1, %c0_2] : memref<128x128xf32, #tpu.memory_space<vmem>>, vector<128x128xf32>
    %cst = arith.constant dense<0.000000e+00> : vector<32x128xf32>
    %2 = tpu.matmul %0, %1, %cst {dimension_numbers = #tpu.dot_dimension_numbers<[1], [0], [0], [1], [0, 0, 1, 1], [], []>} : vector<32x128xf32>, vector<128x128xf32>, vector<32x128xf32> -> vector<32x128xf32>
    %c0_3 = arith.constant 0 : index
    %c0_4 = arith.constant 0 : index
    %3 = vector.load %arg3[%c0_3, %c0_4] : memref<1x128xf32, #tpu.memory_space<vmem>>, vector<1x128xf32>
    %4 = vector.broadcast %3 : vector<1x128xf32> to vector<32x128xf32>
    %5 = arith.addf %2, %4 : vector<32x128xf32>
    %cst_5 = arith.constant 0.000000e+00 : f32
    %6 = vector.broadcast %cst_5 : f32 to vector<32x128xf32>
    %7 = arith.maximumf %5, %6 : vector<32x128xf32>
    %c0_6 = arith.constant 0 : index
    %c0_7 = arith.constant 0 : index
    %8 = vector.load %arg4[%c0_6, %c0_7] : memref<128x128xf32, #tpu.memory_space<vmem>>, vector<128x128xf32>
    %cst_8 = arith.constant dense<0.000000e+00> : vector<32x128xf32>
    %9 = tpu.matmul %7, %8, %cst_8 {dimension_numbers = #tpu.dot_dimension_numbers<[1], [0], [0], [1], [0, 0, 1, 1], [], []>} : vector<32x128xf32>, vector<128x128xf32>, vector<32x128xf32> -> vector<32x128xf32>
    %c0_9 = arith.constant 0 : index
    %c0_10 = arith.constant 0 : index
    %10 = vector.load %arg5[%c0_9, %c0_10] : memref<1x128xf32, #tpu.memory_space<vmem>>, vector<1x128xf32>
    %11 = vector.broadcast %10 : vector<1x128xf32> to vector<32x128xf32>
    %12 = arith.addf %9, %11 : vector<32x128xf32>
    %13 = arith.addf %12, %0 : vector<32x128xf32>
    %cst_11 = arith.constant dense<0.000000e+00> : vector<32xf32>
    %14 = vector.multi_reduction <add>, %13, %cst_11 [1] : vector<32x128xf32> to vector<32xf32>
    %15 = vector.shape_cast %14 : vector<32xf32> to vector<32x1xf32>
    %cst_12 = arith.constant 3.125000e-02 : f32
    %16 = vector.broadcast %cst_12 : f32 to vector<32x1xf32>
    %17 = arith.mulf %15, %16 : vector<32x1xf32>
    %18 = vector.broadcast %17 : vector<32x1xf32> to vector<32x128xf32>
    %19 = arith.subf %13, %18 : vector<32x128xf32>
    %20 = tpu.iota {dimensions = array<i32: 1>} : vector<1x128xi32>
    %c32_i32 = arith.constant 32 : i32
    %21 = vector.broadcast %c32_i32 : i32 to vector<1x128xi32>
    %22 = arith.cmpi slt, %20, %21 : vector<1x128xi32>
    %cst_13 = arith.constant 0.000000e+00 : f32
    %23 = vector.shape_cast %22 : vector<1x128xi1> to vector<1x128xi1>
    %24 = vector.broadcast %23 : vector<1x128xi1> to vector<32x128xi1>
    %25 = vector.broadcast %cst_13 : f32 to vector<32x128xf32>
    %26 = arith.select %24, %19, %25 : vector<32x128xi1>, vector<32x128xf32>
    %27 = arith.mulf %26, %26 : vector<32x128xf32>
    %cst_14 = arith.constant dense<0.000000e+00> : vector<32xf32>
    %28 = vector.multi_reduction <add>, %27, %cst_14 [1] : vector<32x128xf32> to vector<32xf32>
    %29 = vector.shape_cast %28 : vector<32xf32> to vector<32x1xf32>
    %cst_15 = arith.constant 3.125000e-02 : f32
    %30 = vector.broadcast %cst_15 : f32 to vector<32x1xf32>
    %31 = arith.mulf %29, %30 : vector<32x1xf32>
    %cst_16 = arith.constant 9.99999974E-6 : f32
    %32 = vector.broadcast %cst_16 : f32 to vector<32x1xf32>
    %33 = arith.addf %31, %32 : vector<32x1xf32>
    %34 = math.rsqrt %33 : vector<32x1xf32>
    %35 = vector.broadcast %34 : vector<32x1xf32> to vector<32x128xf32>
    %36 = arith.mulf %26, %35 : vector<32x128xf32>
    %c0_17 = arith.constant 0 : index
    %c0_18 = arith.constant 0 : index
    %37 = vector.load %arg6[%c0_17, %c0_18] : memref<1x128xf32, #tpu.memory_space<vmem>>, vector<1x128xf32>
    %38 = vector.broadcast %37 : vector<1x128xf32> to vector<32x128xf32>
    %39 = arith.mulf %36, %38 : vector<32x128xf32>
    %c0_19 = arith.constant 0 : index
    %c0_20 = arith.constant 0 : index
    %40 = vector.load %arg7[%c0_19, %c0_20] : memref<1x128xf32, #tpu.memory_space<vmem>>, vector<1x128xf32>
    %41 = vector.broadcast %40 : vector<1x128xf32> to vector<32x128xf32>
    %42 = arith.addf %39, %41 : vector<32x128xf32>
    %c0_21 = arith.constant 0 : index
    %c0_22 = arith.constant 0 : index
    %43 = vector.load %arg8[%c0_21, %c0_22] : memref<32x128xf32, #tpu.memory_space<vmem>>, vector<32x128xf32>
    tpu.vector_store %arg8[%c0_21, %c0_22], %42 {strides = array<i32>} : memref<32x128xf32, #tpu.memory_space<vmem>>, vector<32x128xf32>,
    return
  }
  func.func @transform_0(%arg0: i32) -> (i32, i32) {
    %c0_i32 = arith.constant 0 : i32
    %c0_i32_0 = arith.constant 0 : i32
    return %arg0, %c0_i32 : i32, i32
  }
  func.func @transform_1(%arg0: i32) -> (i32, i32) {
    %c0_i32 = arith.constant 0 : i32
    %c0_i32_0 = arith.constant 0 : i32
    %c0_i32_1 = arith.constant 0 : i32
    return %c0_i32, %c0_i32_0 : i32, i32
  }
  func.func @transform_2(%arg0: i32) -> (i32, i32) {
    %c0_i32 = arith.constant 0 : i32
    %c0_i32_0 = arith.constant 0 : i32
    %c0_i32_1 = arith.constant 0 : i32
    return %c0_i32, %c0_i32_0 : i32, i32
  }
  func.func @transform_3(%arg0: i32) -> (i32, i32) {
    %c0_i32 = arith.constant 0 : i32
    %c0_i32_0 = arith.constant 0 : i32
    %c0_i32_1 = arith.constant 0 : i32
    return %c0_i32, %c0_i32_0 : i32, i32
  }
  func.func @transform_4(%arg0: i32) -> (i32, i32) {
    %c0_i32 = arith.constant 0 : i32
    %c0_i32_0 = arith.constant 0 : i32
    %c0_i32_1 = arith.constant 0 : i32
    return %c0_i32, %c0_i32_0 : i32, i32
  }
  func.func @transform_5(%arg0: i32) -> (i32, i32) {
    %c0_i32 = arith.constant 0 : i32
    %c0_i32_0 = arith.constant 0 : i32
    %c0_i32_1 = arith.constant 0 : i32
    return %c0_i32, %c0_i32_0 : i32, i32
  }
  func.func @transform_6(%arg0: i32) -> (i32, i32) {
    %c0_i32 = arith.constant 0 : i32
    %c0_i32_0 = arith.constant 0 : i32
    %c0_i32_1 = arith.constant 0 : i32
    return %c0_i32, %c0_i32_0 : i32, i32
  }
  func.func @transform_7(%arg0: i32) -> (i32, i32) {
    %c0_i32 = arith.constant 0 : i32
    %c0_i32_0 = arith.constant 0 : i32
    return %arg0, %c0_i32 : i32, i32
  }
}

</mosaic_0001>

<llo_original>
// kernel: tpu_custom_call.1
$region0: #{tpu_custom_call.1}
  #allocation0 [shape = 'u32[]', space=smem, size = 0x4, offset = 0x4, fixed_abs, tag = 'smem constant byte address 0x4 - core index']
  #allocation1 [shape = 'u32[72,128]{1,0:T(1,128)}', space=vmem, size = 0x9000, scoped, tag = 'internal scratch']
  %s0 = inlined_call_operand.hbm [shape: f32[32,128], index: 0, kind: input, shape index: {}]
  %s1 = inlined_call_operand.hbm [shape: f32[128,128], index: 1, kind: input, shape index: {}]
  %s2 = inlined_call_operand.vmem [shape: f32[1,128], index: 2, kind: input, shape index: {}]
  %s3 = inlined_call_operand.hbm [shape: f32[128,128], index: 3, kind: input, shape index: {}]
  %s4 = inlined_call_operand.vmem [shape: f32[1,128], index: 4, kind: input, shape index: {}]
  %s5 = inlined_call_operand.vmem [shape: f32[1,128], index: 5, kind: input, shape index: {}]
  %s6 = inlined_call_operand.vmem [shape: f32[1,128], index: 6, kind: input, shape index: {}]
  %s7 = inlined_call_operand.hbm [shape: f32[32,128], index: 7, kind: output, shape index: {}]
  %s8 = sld [smem:[#allocation0]]
  $region50: #{tpu_custom_call.1} parent=0
    _
  %s10 = ssub.s32 1, %s8
  %s11 = scalar_select 0, %s10, %s8
  $region1: #{tpu_custom_call.1} parent=0
    #allocation2 [shape = 'u8[16384]{0}', space=vmem, size = 0x4000, scoped, tag = 'input window, operand 0, single buffered']
    #allocation3 [shape = 's32[1]{0}', space=sflag, size = 0x4, scoped, tag = 'scoped memory for tpu_custom_call.1']
    #allocation4 [shape = 's32[1]{0}', space=sflag, size = 0x4, scoped, tag = 'scoped memory for tpu_custom_call.1']
    #allocation5 [shape = 'u8[65536]{0}', space=vmem, size = 0x10000, scoped, tag = 'input window, operand 1, single buffered']
    #allocation6 [shape = 's32[1]{0}', space=sflag, size = 0x4, scoped, tag = 'scoped memory for tpu_custom_call.1']
    #allocation7 [shape = 'u8[65536]{0}', space=vmem, size = 0x10000, scoped, tag = 'input window, operand 3, single buffered']
    #allocation8 [shape = 'u8[16384]{0}', space=vmem, size = 0x4000, scoped, tag = 'output window, operand 0, single buffered']
    %12 = vsyncpa [#allocation3], 0
    %13 = vsyncpa [#allocation6], 0
    %14 = vsyncpa [#allocation4], 0
    // Predicated region
    $region2: #{tpu_custom_call.1} parent=1 // pred_check
      _
    $region3: #{tpu_custom_call.1} parent=1 // pred_check_branch
      %16 = sbr.rel (0) target = $region5
    $region4: #{tpu_custom_call.1} parent=1 // pred_region
      %18 = vsyncadd [#allocation3], 0
      %s19 = sshll.u32 %s0, 4
      %s20 = int_to_ptr.hbm [resolvable:$true] %s19
      %s21 = sshll.u32 [#allocation2], 4
      %s22 = int_to_ptr.vmem [resolvable:$true] %s21
      %27 = dma.hbm_to_vmem [thread:$0]  %s20, 512, %s22, [#allocation3], 128, 128, 8
    $region5: #{tpu_custom_call.1} parent=1 // pred_fallthru
      _
    // Predicated region
    $region6: #{tpu_custom_call.1} parent=1 // pred_check
      _
    $region7: #{tpu_custom_call.1} parent=1 // pred_check_branch
      %29 = sbr.rel (0) target = $region9
    $region8: #{tpu_custom_call.1} parent=1 // pred_region
      %31 = vsyncadd [#allocation6], 0
      %s32 = sshll.u32 %s1, 4
      %s33 = int_to_ptr.hbm [resolvable:$true] %s32
      %s34 = sshll.u32 [#allocation5], 4
      %s35 = int_to_ptr.vmem [resolvable:$true] %s34
      %40 = dma.hbm_to_vmem [thread:$0]  %s33, 2048, %s35, [#allocation6], 128, 128, 8
    $region9: #{tpu_custom_call.1} parent=1 // pred_fallthru
      _
    // Predicated region
    $region10: #{tpu_custom_call.1} parent=1 // pred_check
      _
    $region11: #{tpu_custom_call.1} parent=1 // pred_check_branch
      %42 = sbr.rel (0) target = $region13
    $region12: #{tpu_custom_call.1} parent=1 // pred_region
      _
    $region13: #{tpu_custom_call.1} parent=1 // pred_fallthru
      _
    // Predicated region
    $region14: #{tpu_custom_call.1} parent=1 // pred_check
      _
    $region15: #{tpu_custom_call.1} parent=1 // pred_check_branch
      %44 = sbr.rel (0) target = $region17
    $region16: #{tpu_custom_call.1} parent=1 // pred_region
      %46 = vsyncadd [#allocation6], 0
      %s47 = sshll.u32 %s3, 4
      %s48 = int_to_ptr.hbm [resolvable:$true] %s47
      %s49 = sshll.u32 [#allocation7], 4
      %s50 = int_to_ptr.vmem [resolvable:$true] %s49
      %55 = dma.hbm_to_vmem [thread:$0]  %s48, 2048, %s50, [#allocation6], 128, 128, 8
    $region17: #{tpu_custom_call.1} parent=1 // pred_fallthru
      _
    // Predicated region
    $region18: #{tpu_custom_call.1} parent=1 // pred_check
      _
    $region19: #{tpu_custom_call.1} parent=1 // pred_check_branch
      %57 = sbr.rel (0) target = $region21
    $region20: #{tpu_custom_call.1} parent=1 // pred_region
      _
    $region21: #{tpu_custom_call.1} parent=1 // pred_fallthru
      _
    // Predicated region
    $region22: #{tpu_custom_call.1} parent=1 // pred_check
      _
    $region23: #{tpu_custom_call.1} parent=1 // pred_check_branch
      %59 = sbr.rel (0) target = $region25
    $region24: #{tpu_custom_call.1} parent=1 // pred_region
      _
    $region25: #{tpu_custom_call.1} parent=1 // pred_fallthru
      _
    // Predicated region
    $region26: #{tpu_custom_call.1} parent=1 // pred_check
      _
    $region27: #{tpu_custom_call.1} parent=1 // pred_check_branch
      %61 = sbr.rel (0) target = $region29
    $region28: #{tpu_custom_call.1} parent=1 // pred_region
      _
    $region29: #{tpu_custom_call.1} parent=1 // pred_fallthru
      _
    // Predicated region
    $region30: #{tpu_custom_call.1} parent=1 // pred_check
      _
    $region31: #{tpu_custom_call.1} parent=1 // pred_check_branch
      %63 = sbr.rel (0) target = $region33
    $region32: #{tpu_custom_call.1} parent=1 // pred_region
      %65 = dma.done [#allocation3], 512
    $region33: #{tpu_custom_call.1} parent=1 // pred_fallthru
      _
    // Predicated region
    $region34: #{tpu_custom_call.1} parent=1 // pred_check
      _
    $region35: #{tpu_custom_call.1} parent=1 // pred_check_branch
      %67 = sbr.rel (0) target = $region37
    $region36: #{tpu_custom_call.1} parent=1 // pred_region
      %69 = dma.done [#allocation6], 2048
    $region37: #{tpu_custom_call.1} parent=1 // pred_fallthru
      _
    // Predicated region
    $region38: #{tpu_custom_call.1} parent=1 // pred_check
      _
    $region39: #{tpu_custom_call.1} parent=1 // pred_check_branch
      %71 = sbr.rel (0) target = $region41
    $region40: #{tpu_custom_call.1} parent=1 // pred_region
      %73 = dma.done [#allocation6], 2048
    $region41: #{tpu_custom_call.1} parent=1 // pred_fallthru
      _
    %v74 = vld [vmem:[#allocation2] sm:$0xff]
    %v75 = vld [vmem:[#allocation2 + $0x8] sm:$0xff]
    %v76 = vld [vmem:[#allocation2 + $0x10] sm:$0xff]
    %v77 = vld [vmem:[#allocation2 + $0x18] sm:$0xff]
    %v78 = vld [vmem:[#allocation5] sm:$0xff]
    %v79 = vld [vmem:[#allocation5 + $0x8] sm:$0xff]
    %v80 = vld [vmem:[#allocation5 + $0x10] sm:$0xff]
    %v81 = vld [vmem:[#allocation5 + $0x18] sm:$0xff]
    %v82 = vld [vmem:[#allocation5 + $0x20] sm:$0xff]
    %v83 = vld [vmem:[#allocation5 + $0x28] sm:$0xff]
    %v84 = vld [vmem:[#allocation5 + $0x30] sm:$0xff]
    %v85 = vld [vmem:[#allocation5 + $0x38] sm:$0xff]
    %v86 = vld [vmem:[#allocation5 + $0x40] sm:$0xff]
    %v87 = vld [vmem:[#allocation5 + $0x48] sm:$0xff]
    %v88 = vld [vmem:[#allocation5 + $0x50] sm:$0xff]
    %v89 = vld [vmem:[#allocation5 + $0x58] sm:$0xff]
    %v90 = vld [vmem:[#allocation5 + $0x60] sm:$0xff]
    %v91 = vld [vmem:[#allocation5 + $0x68] sm:$0xff]
    %v92 = vld [vmem:[#allocation5 + $0x70] sm:$0xff]
    %v93 = vld [vmem:[#allocation5 + $0x78] sm:$0xff]
    %v94 = vld [vmem:[%s2] sm:$0x1]
    %v96 = vperm.slane %v94, 0
    %98 = vmatpush.msra.mxu0 %v93
    %99 = vmatpush.msra.mxu0 %v92
    %100 = vmatpush.msra.mxu0 %v91
    %101 = vmatpush.msra.mxu0 %v90
    %102 = vmatpush.msra.mxu0 %v89
    %103 = vmatpush.msra.mxu0 %v88
    %104 = vmatpush.msra.mxu0 %v87
    %105 = vmatpush.msra.mxu0 %v86
    %106 = vmatpush.msra.mxu0 %v85
    %107 = vmatpush.msra.mxu0 %v84
    %108 = vmatpush.msra.mxu0 %v83
    %109 = vmatpush.msra.mxu0 %v82
    %110 = vmatpush.msra.mxu0 %v81
    %111 = vmatpush.msra.mxu0 %v80
    %112 = vmatpush.msra.mxu0 %v79
    %113 = vmatpush.msra.mxu0 %v78
    %114 = vmatmul.f32.gmra.mxu0 %v74
    %v115 = vpop.f32.mrf.mxu0
    %v116 = vadd.f32 %v96, %v115
    %117 = vmatmul.f32.gmra.mxu0 %v75
    %v118 = vpop.f32.mrf.mxu0
    %v119 = vadd.f32 %v96, %v118
    %120 = vmatmul.f32.gmra.mxu0 %v76
    %v121 = vpop.f32.mrf.mxu0
    %v122 = vadd.f32 %v96, %v121
    %123 = vmatmul.f32.gmra.mxu0 %v77
    %v124 = vpop.f32.mrf.mxu0
    %v125 = vadd.f32 %v96, %v124
    %126 = vdwg.mxu0
    %v127 = vmax.f32 %v116, 0.0
    %v128 = vmax.f32 %v119, 0.0
    %v129 = vmax.f32 %v122, 0.0
    %v130 = vmax.f32 %v125, 0.0
    %v131 = vld [vmem:[#allocation7] sm:$0xff]
    %v132 = vld [vmem:[#allocation7 + $0x8] sm:$0xff]
    %v133 = vld [vmem:[#allocation7 + $0x10] sm:$0xff]
    %v134 = vld [vmem:[#allocation7 + $0x18] sm:$0xff]
    %v135 = vld [vmem:[#allocation7 + $0x20] sm:$0xff]
    %v136 = vld [vmem:[#allocation7 + $0x28] sm:$0xff]
    %v137 = vld [vmem:[#allocation7 + $0x30] sm:$0xff]
    %v138 = vld [vmem:[#allocation7 + $0x38] sm:$0xff]
    %v139 = vld [vmem:[#allocation7 + $0x40] sm:$0xff]
    %v140 = vld [vmem:[#allocation7 + $0x48] sm:$0xff]
    %v141 = vld [vmem:[#allocation7 + $0x50] sm:$0xff]
    %v142 = vld [vmem:[#allocation7 + $0x58] sm:$0xff]
    %v143 = vld [vmem:[#allocation7 + $0x60] sm:$0xff]
    %v144 = vld [vmem:[#allocation7 + $0x68] sm:$0xff]
    %v145 = vld [vmem:[#allocation7 + $0x70] sm:$0xff]
    %v146 = vld [vmem:[#allocation7 + $0x78] sm:$0xff]
    %v147 = vld [vmem:[%s4] sm:$0x1]
    %v149 = vperm.slane %v147, 0
    %151 = vmatpush.msra.mxu0 %v146
    %152 = vmatpush.msra.mxu0 %v145
    %153 = vmatpush.msra.mxu0 %v144
    %154 = vmatpush.msra.mxu0 %v143
    %155 = vmatpush.msra.mxu0 %v142
    %156 = vmatpush.msra.mxu0 %v141
    %157 = vmatpush.msra.mxu0 %v140
    %158 = vmatpush.msra.mxu0 %v139
    %159 = vmatpush.msra.mxu0 %v138
    %160 = vmatpush.msra.mxu0 %v137
    %161 = vmatpush.msra.mxu0 %v136
    %162 = vmatpush.msra.mxu0 %v135
    %163 = vmatpush.msra.mxu0 %v134
    %164 = vmatpush.msra.mxu0 %v133
    %165 = vmatpush.msra.mxu0 %v132
    %166 = vmatpush.msra.mxu0 %v131
    %167 = vmatmul.f32.gmra.mxu0 %v127
    %v168 = vpop.f32.mrf.mxu0
    %v169 = vadd.f32 %v149, %v168
    %170 = vmatmul.f32.gmra.mxu0 %v128
    %v171 = vpop.f32.mrf.mxu0
    %v172 = vadd.f32 %v149, %v171
    %173 = vmatmul.f32.gmra.mxu0 %v129
    %v174 = vpop.f32.mrf.mxu0
    %v175 = vadd.f32 %v149, %v174
    %176 = vmatmul.f32.gmra.mxu0 %v130
    %v177 = vpop.f32.mrf.mxu0
    %v178 = vadd.f32 %v149, %v177
    %179 = vdwg.mxu0
    %v180 = vadd.f32 %v169, %v74
    %v181 = vadd.f32 %v172, %v75
    %v182 = vadd.f32 %v175, %v76
    %v183 = vadd.f32 %v178, %v77
    %184 = vadd.xlane.f32.xlu0 %v180
    %v185 = vpop.xlane.xlu0 %184
    %186 = vadd.xlane.f32.xlu0 %v181
    %v187 = vpop.xlane.xlu0 %186
    %188 = vadd.xlane.f32.xlu0 %v182
    %v189 = vpop.xlane.xlu0 %188
    %190 = vadd.xlane.f32.xlu0 %v183
    %v191 = vpop.xlane.xlu0 %190
    %v192 = vmul.f32 %v185, 0.03125
    %v193 = vmul.f32 %v187, 0.03125
    %v194 = vmul.f32 %v189, 0.03125
    %v195 = vmul.f32 %v191, 0.03125
    %v196 = vsub.f32 %v180, %v192
    %v197 = vsub.f32 %v181, %v193
    %v198 = vsub.f32 %v182, %v194
    %v199 = vsub.f32 %v183, %v195
    %v200 = vlaneseq
    %v201 = vand.u32 %v200, 127
    %vm202 = vcmp.lt.s32.totalorder %v201, 32
    %v203 = vsel %vm202, 1, 0
    %vm204 = vcmp.eq.s32.totalorder %v203, 1
    %v205 = vsel %vm204, %v196, 0.0
    %v206 = vsel %vm204, %v197, 0.0
    %v207 = vsel %vm204, %v198, 0.0
    %v208 = vsel %vm204, %v199, 0.0
    %v209 = vmul.f32 %v205, %v205
    %v210 = vmul.f32 %v206, %v206
    %v211 = vmul.f32 %v207, %v207
    %v212 = vmul.f32 %v208, %v208
    %213 = vadd.xlane.f32.xlu0 %v209
    %v214 = vpop.xlane.xlu0 %213
    %215 = vadd.xlane.f32.xlu0 %v210
    %v216 = vpop.xlane.xlu0 %215
    %217 = vadd.xlane.f32.xlu0 %v211
    %v218 = vpop.xlane.xlu0 %217
    %219 = vadd.xlane.f32.xlu0 %v212
    %v220 = vpop.xlane.xlu0 %219
    %v221 = vmul.f32 %v214, 0.03125
    %v222 = vmul.f32 %v216, 0.03125
    %v223 = vmul.f32 %v218, 0.03125
    %v224 = vmul.f32 %v220, 0.03125
    %v225 = vadd.f32 %v221, 1e-05
    %v226 = vadd.f32 %v222, 1e-05
    %v227 = vadd.f32 %v223, 1e-05
    %v228 = vadd.f32 %v224, 1e-05
    %v229 = vrsqrt.pop %v225
    %v230 = vmul.f32 %v229, %v225
    %v231 = vmul.f32 %v230, %v229
    %v232 = vmul.f32 0.5, %v231
    %v233 = vsub.f32 1.5, %v232
    %v234 = vmul.f32 %v229, %v233
    %vm235 = vweird.f32 %v225
    %vm236 = vweird.f32 %v229
    %vm237 = vmor %vm235, %vm236
    %v238 = vsel %vm237, %v229, %v234
    %v239 = vrsqrt.pop %v226
    %v240 = vmul.f32 %v239, %v226
    %v241 = vmul.f32 %v240, %v239
    %v242 = vmul.f32 0.5, %v241
    %v243 = vsub.f32 1.5, %v242
    %v244 = vmul.f32 %v239, %v243
    %vm245 = vweird.f32 %v226
    %vm246 = vweird.f32 %v239
    %vm247 = vmor %vm245, %vm246
    %v248 = vsel %vm247, %v239, %v244
    %v249 = vrsqrt.pop %v227
    %v250 = vmul.f32 %v249, %v227
    %v251 = vmul.f32 %v250, %v249
    %v252 = vmul.f32 0.5, %v251
    %v253 = vsub.f32 1.5, %v252
    %v254 = vmul.f32 %v249, %v253
    %vm255 = vweird.f32 %v227
    %vm256 = vweird.f32 %v249
    %vm257 = vmor %vm255, %vm256
    %v258 = vsel %vm257, %v249, %v254
    %v259 = vrsqrt.pop %v228
    %v260 = vmul.f32 %v259, %v228
    %v261 = vmul.f32 %v260, %v259
    %v262 = vmul.f32 0.5, %v261
    %v263 = vsub.f32 1.5, %v262
    %v264 = vmul.f32 %v259, %v263
    %vm265 = vweird.f32 %v228
    %vm266 = vweird.f32 %v259
    %vm267 = vmor %vm265, %vm266
    %v268 = vsel %vm267, %v259, %v264
    %v269 = vmul.f32 %v205, %v238
    %v270 = vmul.f32 %v206, %v248
    %v271 = vmul.f32 %v207, %v258
    %v272 = vmul.f32 %v208, %v268
    %v273 = vld [vmem:[%s5] sm:$0x1]
    %v275 = vperm.slane %v273, 0
    %v277 = vmul.f32 %v269, %v275
    %v278 = vmul.f32 %v270, %v275
    %v279 = vmul.f32 %v271, %v275
    %v280 = vmul.f32 %v272, %v275
    %v281 = vld [vmem:[%s6] sm:$0x1]
    %v283 = vperm.slane %v281, 0
    %v285 = vadd.f32 %v277, %v283
    %v286 = vadd.f32 %v278, %v283
    %v287 = vadd.f32 %v279, %v283
    %v288 = vadd.f32 %v280, %v283
    %289 = vst [vmem:[#allocation8] sm:$0xff] %v285
    %290 = vst [vmem:[#allocation8 + $0x8] sm:$0xff] %v286
    %291 = vst [vmem:[#allocation8 + $0x10] sm:$0xff] %v287
    %292 = vst [vmem:[#allocation8 + $0x18] sm:$0xff] %v288
    // Predicated region
    $region42: #{tpu_custom_call.1} parent=1 // pred_check
      _
    $region43: #{tpu_custom_call.1} parent=1 // pred_check_branch
      %294 = sbr.rel (0) target = $region45
    $region44: #{tpu_custom_call.1} parent=1 // pred_region
      %296 = vsyncadd [#allocation4], 0
      %s297 = sshll.u32 [#allocation8], 4
      %s298 = int_to_ptr.vmem [resolvable:$true] %s297
      %s299 = sshll.u32 %s7, 4
      %s300 = int_to_ptr.hbm [resolvable:$true] %s299
      %305 = dma.vmem_to_hbm [thread:$0]  %s298, 512, %s300, [#allocation4], 128, 128, 8
    $region45: #{tpu_custom_call.1} parent=1 // pred_fallthru
      _
    // Predicated region
    $region46: #{tpu_custom_call.1} parent=1 // pred_check
      _
    $region47: #{tpu_custom_call.1} parent=1 // pred_check_branch
      %307 = sbr.rel (0) target = $region49
    $region48: #{tpu_custom_call.1} parent=1 // pred_region
      %309 = dma.done [#allocation4], 512
    $region49: #{tpu_custom_call.1} parent=1 // pred_fallthru
      _
    %310 = vsyncpa [#allocation3], 1
    %311 = vsyncpa [#allocation6], 1
    %312 = vsyncpa [#allocation4], 1

</llo_original>
